<compile_context>
chip_gen: v7x
topology: tpu7x:2x2x1
jax: 0.10.0
libtpu: 0.0.40
codegen_flags: <defaults>
</compile_context>

<pallas_src>
import math
import jax
import jax.numpy as jnp
from jax.experimental import pallas as pl
from jax.experimental.pallas import tpu as pltpu

# --- small, TPU-friendly shapes (hidden on the lane axis) ---
B = 8          # batch
S = 16         # sequence length
HID = 128      # config.hidden_size
INTER = 512    # config.intermediate_size
TM = 64        # rows per grid step (M = B*S = 128 -> grid of 2, shardable)


def _gelu_tanh(x):
    """GELU, tanh approximation (ACT2FN 'gelu_new'); f32 in, f32 out."""
    c = math.sqrt(2.0 / math.pi)
    return 0.5 * x * (1.0 + jnp.tanh(c * (x + 0.044715 * x * x * x)))


def ffn_kernel(x_ref, w1_ref, b1_ref, w2_ref, b2_ref, o_ref):
    """Fused: x @ W1 + b1 -> GELU -> @ W2 + b2 for one [TM, HID] row tile."""
    x = x_ref[...]                                              # [TM, HID] f32
    # MXU prefers bf16 inputs on all generations; accumulate in f32.
    h = jnp.dot(x.astype(jnp.bfloat16), w1_ref[...],
                preferred_element_type=jnp.float32) + b1_ref[...]   # [TM, INTER] f32
    a = _gelu_tanh(h)                                           # f32 (EUP tanh in f32)
    # TODO(synk): nn.Dropout(activation_dropout) is identity at inference; omitted.
    y = jnp.dot(a.astype(jnp.bfloat16), w2_ref[...],
                preferred_element_type=jnp.float32) + b2_ref[...]   # [TM, HID] f32
    o_ref[...] = y                                              # lane-dense store


@jax.jit
def feed_forward(x, params):
    """x: [B, S, HID] f32 -> [B, S, HID] f32."""
    w1, b1, w2, b2 = params
    b, s, h = x.shape
    m = b * s
    assert m % TM == 0 and h == HID
    x2 = x.reshape(m, h)

    out = pl.pallas_call(
        ffn_kernel,
        out_shape=jax.ShapeDtypeStruct((m, HID), jnp.float32),
        grid_spec=pltpu.PrefetchScalarGridSpec(
            num_scalar_prefetch=0,
            grid=(m // TM,),
            in_specs=[
                pl.BlockSpec((TM, HID), lambda i: (i, 0)),      # activations, tiled over rows
                pl.BlockSpec((HID, INTER), lambda i: (0, 0)),   # W1 (bf16), resident
                pl.BlockSpec((1, INTER), lambda i: (0, 0)),     # b1 (f32)
                pl.BlockSpec((INTER, HID), lambda i: (0, 0)),   # W2 (bf16), resident
                pl.BlockSpec((1, HID), lambda i: (0, 0)),       # b2 (f32)
            ],
            out_specs=pl.BlockSpec((TM, HID), lambda i: (i, 0)),
        ),
        compiler_params=pltpu.CompilerParams(
            dimension_semantics=("parallel",)),
    )(x2, w1.astype(jnp.bfloat16), b1, w2.astype(jnp.bfloat16), b2)
    return out.reshape(b, s, h)


def init_params(key):
    """nn.Linear default init: U(-1/sqrt(fan_in), 1/sqrt(fan_in)); stored [in, out]."""
    k_w1, k_b1, k_w2, k_b2 = jax.random.split(key, 4)
    bnd1 = 1.0 / math.sqrt(HID)
    w1 = jax.random.uniform(k_w1, (HID, INTER), jnp.float32, -bnd1, bnd1)
    b1 = jax.random.uniform(k_b1, (1, INTER), jnp.float32, -bnd1, bnd1)
    bnd2 = 1.0 / math.sqrt(INTER)
    w2 = jax.random.uniform(k_w2, (INTER, HID), jnp.float32, -bnd2, bnd2)
    b2 = jax.random.uniform(k_b2, (1, HID), jnp.float32, -bnd2, bnd2)
    return w1, b1, w2, b2


def reference_forward(x, params):
    """Plain-JAX reference with the same dtype policy (bf16 matmul inputs, f32 acc)."""
    w1, b1, w2, b2 = params
    b, s, h = x.shape
    x2 = x.reshape(b * s, h)
    h1 = jnp.dot(x2.astype(jnp.bfloat16), w1.astype(jnp.bfloat16),
                 preferred_element_type=jnp.float32) + b1
    a = _gelu_tanh(h1)
    y = jnp.dot(a.astype(jnp.bfloat16), w2.astype(jnp.bfloat16),
                preferred_element_type=jnp.float32) + b2
    return y.reshape(b, s, h)


if __name__ == "__main__":
    key = jax.random.PRNGKey(0)
    k_x, k_params = jax.random.split(key)

    x = jax.random.normal(k_x, (B, S, HID), dtype=jnp.float32)
    params = init_params(k_params)

    y = feed_forward(x, params)
    y = jax.block_until_ready(y)

    ref = reference_forward(x, params)
    assert y.shape == (B, S, HID)
    assert bool(jnp.all(jnp.isfinite(y)))
    assert bool(jnp.allclose(y, ref, rtol=2e-2, atol=2e-2)), "mismatch vs JAX reference"

    print("KERNEL_OK")
</pallas_src>

<mosaic_0001>
module attributes {stable_mosaic.version = 11 : i64} {
  func.func @ffn_kernel(%arg0: i32, %arg1: memref<64x128xf32, #tpu.memory_space<vmem>>, %arg2: memref<128x512xbf16, #tpu.memory_space<vmem>>, %arg3: memref<1x512xf32, #tpu.memory_space<vmem>>, %arg4: memref<512x128xbf16, #tpu.memory_space<vmem>>, %arg5: memref<1x128xf32, #tpu.memory_space<vmem>>, %arg6: memref<64x128xf32, #tpu.memory_space<vmem>>) attributes {dimension_semantics = [#tpu.dimension_semantics<parallel>], iteration_bounds = array<i64: 2>, scalar_prefetch = 0 : i64, scratch_operands = 0 : i64, tpu.core_type = #tpu.core_type<tc>, window_params = [{transform_indices = @transform_0, window_bounds = array<i64: 64, 128>}, {pipeline_mode = #tpu.pipeline_mode<synchronous>, transform_indices = @transform_1, window_bounds = array<i64: 128, 512>}, {pipeline_mode = #tpu.pipeline_mode<synchronous>, transform_indices = @transform_2, window_bounds = array<i64: 1, 512>}, {pipeline_mode = #tpu.pipeline_mode<synchronous>, transform_indices = @transform_3, window_bounds = array<i64: 512, 128>}, {pipeline_mode = #tpu.pipeline_mode<synchronous>, transform_indices = @transform_4, window_bounds = array<i64: 1, 128>}, {transform_indices = @transform_5, window_bounds = array<i64: 64, 128>}]} {
    %c0 = arith.constant 0 : index
    %c0_0 = arith.constant 0 : index
    %0 = vector.load %arg1[%c0, %c0_0] : memref<64x128xf32, #tpu.memory_space<vmem>>, vector<64x128xf32>
    %1 = arith.truncf %0 : vector<64x128xf32> to vector<64x128xbf16>
    %c0_1 = arith.constant 0 : index
    %c0_2 = arith.constant 0 : index
    %2 = vector.load %arg2[%c0_1, %c0_2] : memref<128x512xbf16, #tpu.memory_space<vmem>>, vector<128x512xbf16>
    %cst = arith.constant dense<0.000000e+00> : vector<64x512xf32>
    %3 = tpu.matmul %1, %2, %cst {dimension_numbers = #tpu.dot_dimension_numbers<[1], [0], [0], [1], [0, 0, 1, 1], [], []>} : vector<64x128xbf16>, vector<128x512xbf16>, vector<64x512xf32> -> vector<64x512xf32>
    %c0_3 = arith.constant 0 : index
    %c0_4 = arith.constant 0 : index
    %4 = vector.load %arg3[%c0_3, %c0_4] : memref<1x512xf32, #tpu.memory_space<vmem>>, vector<1x512xf32>
    %5 = vector.broadcast %4 : vector<1x512xf32> to vector<64x512xf32>
    %6 = arith.addf %3, %5 : vector<64x512xf32>
    %cst_5 = arith.constant 5.000000e-01 : f32
    %7 = vector.broadcast %cst_5 : f32 to vector<64x512xf32>
    %8 = arith.mulf %7, %6 : vector<64x512xf32>
    %cst_6 = arith.constant 4.471500e-02 : f32
    %9 = vector.broadcast %cst_6 : f32 to vector<64x512xf32>
    %10 = arith.mulf %9, %6 : vector<64x512xf32>
    %11 = arith.mulf %10, %6 : vector<64x512xf32>
    %12 = arith.mulf %11, %6 : vector<64x512xf32>
    %13 = arith.addf %6, %12 : vector<64x512xf32>
    %cst_7 = arith.constant 0.797884583 : f32
    %14 = vector.broadcast %cst_7 : f32 to vector<64x512xf32>
    %15 = arith.mulf %14, %13 : vector<64x512xf32>
    %16 = math.tanh %15 : vector<64x512xf32>
    %cst_8 = arith.constant 1.000000e+00 : f32
    %17 = vector.broadcast %cst_8 : f32 to vector<64x512xf32>
    %18 = arith.addf %17, %16 : vector<64x512xf32>
    %19 = arith.mulf %8, %18 : vector<64x512xf32>
    %20 = arith.truncf %19 : vector<64x512xf32> to vector<64x512xbf16>
    %c0_9 = arith.constant 0 : index
    %c0_10 = arith.constant 0 : index
    %21 = vector.load %arg4[%c0_9, %c0_10] : memref<512x128xbf16, #tpu.memory_space<vmem>>, vector<512x128xbf16>
    %cst_11 = arith.constant dense<0.000000e+00> : vector<64x128xf32>
    %22 = tpu.matmul %20, %21, %cst_11 {dimension_numbers = #tpu.dot_dimension_numbers<[1], [0], [0], [1], [0, 0, 1, 1], [], []>} : vector<64x512xbf16>, vector<512x128xbf16>, vector<64x128xf32> -> vector<64x128xf32>
    %c0_12 = arith.constant 0 : index
    %c0_13 = arith.constant 0 : index
    %23 = vector.load %arg5[%c0_12, %c0_13] : memref<1x128xf32, #tpu.memory_space<vmem>>, vector<1x128xf32>
    %24 = vector.broadcast %23 : vector<1x128xf32> to vector<64x128xf32>
    %25 = arith.addf %22, %24 : vector<64x128xf32>
    %c0_14 = arith.constant 0 : index
    %c0_15 = arith.constant 0 : index
    %26 = vector.load %arg6[%c0_14, %c0_15] : memref<64x128xf32, #tpu.memory_space<vmem>>, vector<64x128xf32>
    tpu.vector_store %arg6[%c0_14, %c0_15], %25 {strides = array<i32>} : memref<64x128xf32, #tpu.memory_space<vmem>>, vector<64x128xf32>,
    return
  }
  func.func @transform_0(%arg0: i32) -> (i32, i32) {
    %c0_i32 = arith.constant 0 : i32
    %c0_i32_0 = arith.constant 0 : i32
    return %arg0, %c0_i32 : i32, i32
  }
  func.func @transform_1(%arg0: i32) -> (i32, i32) {
    %c0_i32 = arith.constant 0 : i32
    %c0_i32_0 = arith.constant 0 : i32
    %c0_i32_1 = arith.constant 0 : i32
    return %c0_i32, %c0_i32_0 : i32, i32
  }
  func.func @transform_2(%arg0: i32) -> (i32, i32) {
    %c0_i32 = arith.constant 0 : i32
    %c0_i32_0 = arith.constant 0 : i32
    %c0_i32_1 = arith.constant 0 : i32
    return %c0_i32, %c0_i32_0 : i32, i32
  }
  func.func @transform_3(%arg0: i32) -> (i32, i32) {
    %c0_i32 = arith.constant 0 : i32
    %c0_i32_0 = arith.constant 0 : i32
    %c0_i32_1 = arith.constant 0 : i32
    return %c0_i32, %c0_i32_0 : i32, i32
  }
  func.func @transform_4(%arg0: i32) -> (i32, i32) {
    %c0_i32 = arith.constant 0 : i32
    %c0_i32_0 = arith.constant 0 : i32
    %c0_i32_1 = arith.constant 0 : i32
    return %c0_i32, %c0_i32_0 : i32, i32
  }
  func.func @transform_5(%arg0: i32) -> (i32, i32) {
    %c0_i32 = arith.constant 0 : i32
    %c0_i32_0 = arith.constant 0 : i32
    return %arg0, %c0_i32 : i32, i32
  }
}

</mosaic_0001>

<llo_original>
// kernel: feed_forward.1
$region0: #{feed_forward.1}
  #allocation0 [shape = 'u32[]', space=smem, size = 0x4, offset = 0x4, fixed_abs, tag = 'smem constant byte address 0x4 - core index']
  #allocation1 [shape = 'u32[144,128]{1,0:T(1,128)}', space=vmem, size = 0x12000, scoped, tag = 'internal scratch']
  %s0 = inlined_call_operand.vmem [shape: f32[128,128], index: 0, kind: input, shape index: {}]
  %s1 = inlined_call_operand.vmem [shape: bf16[128,512], index: 1, kind: input, shape index: {}]
  %s2 = inlined_call_operand.vmem [shape: f32[1,512], index: 2, kind: input, shape index: {}]
  %s3 = inlined_call_operand.vmem [shape: bf16[512,128], index: 3, kind: input, shape index: {}]
  %s4 = inlined_call_operand.vmem [shape: f32[1,128], index: 4, kind: input, shape index: {}]
  %s5 = inlined_call_operand.hbm [shape: f32[128,128], index: 5, kind: output, shape index: {}]
  %s6 = sld [smem:[#allocation0]]
  $region53: #{feed_forward.1} parent=0
    _
  %s8 = ssub.s32 1, %s6
  %s9 = scalar_select 0, %s8, %s6
  $region1: #{feed_forward.1} parent=0
    #allocation2 [shape = 'u8[65536]{0}', space=vmem, size = 0x10000, scoped, tag = 'output window, operand 0']
    #allocation3 [shape = 's32[2]{0}', space=sflag, size = 0x8, scoped, tag = 'scoped memory for feed_forward.1']
    %10 = vsyncpa [#allocation3], 0
    %s11 = scalar_lea.sflag [#allocation3], 1
    %12 = vsyncpa %s11, 0
    loop: start=0, step=1, limit=4
    $region2: #{feed_forward.1} parent=1 // loop_pre_header
      _
    $region3: #{feed_forward.1} parent=1 // loop_header
      %s14 = sphi 0, %s18
      %p15 = scmp.ge.s32.totalorder %s14, 4
      %s24 = sphi 0, %s26
      %s27 = sphi 0, %s24
      %s28 = sphi 0, %s27
      %s44 = sphi 0, %s28
      %s48 = sphi 0, %s48
      %s50 = sphi 0, %s48
      %s51 = sphi 0, %s50
      %s65 = sphi 0, %s51
      %s69 = sphi 0, %s69
      %s71 = sphi 0, %s69
      %s72 = sphi 0, %s71
      %s86 = sphi 0, %s72
      %s90 = sphi 0, %s90
      %s92 = sphi 0, %s90
      %s93 = sphi 0, %s92
      %s107 = sphi 0, %s93
      %s111 = sphi 0, %s111
      %s113 = sphi 0, %s111
      %s114 = sphi 0, %s113
      %s128 = sphi 0, %s114
      %s134 = sphi 0, %s136
      %s137 = sphi 0, %s134
      %s138 = sphi 0, %s137
      %s154 = sphi 0, %s138
    $region4: #{feed_forward.1} parent=1 // loop_header_branch
      %17 = sbr.rel (%p15) target = $region8
    $region5: #{feed_forward.1} parent=1 // loop_body
      %s19 = ssub.s32 %s14, 1
      %s20 = ssub.s32 %s14, 2
      %s21 = sadd.s32 %s14, 1
      %s22 = ssub.s32 %s14, %s21
      %p23 = scmp.eq.s32.totalorder %s22, 0
      %s25 = sadd.s32 %s24, 1
      %s26 = scalar_select %p23, %s24, %s25
      %p29 = pneg %p23
      %p30 = scmp.eq.s32.totalorder %s14, 1
      %p31 = por %p29, %p30
      %p32 = scmp.ne.s32.totalorder %s24, %s27
      %p33 = scmp.eq.s32.totalorder %s14, 0
      %p34 = por %p32, %p33
      %p35 = scmp.ne.s32.totalorder %s24, %s27
      %p36 = scmp.eq.s32.totalorder %s19, 1
      %p37 = por %p35, %p36
      %p38 = scmp.ne.s32.totalorder %s27, %s28
      %p39 = scmp.eq.s32.totalorder %s19, 0
      %p40 = por %p38, %p39
      %p41 = scmp.ne.s32.totalorder %s27, %s28
      %p42 = scmp.eq.s32.totalorder %s20, 1
      %p43 = por %p41, %p42
      %p45 = scmp.ne.s32.totalorder %s28, %s44
      %p46 = scmp.eq.s32.totalorder %s20, 0
      %p47 = por %p45, %p46
      %s49 = sadd.s32 %s48, 1
      %p52 = scmp.eq.s32.totalorder %s14, 1
      %p53 = scmp.ne.s32.totalorder %s48, %s50
      %p54 = scmp.eq.s32.totalorder %s14, 0
      %p55 = por %p53, %p54
      %p56 = scmp.ne.s32.totalorder %s48, %s50
      %p57 = scmp.eq.s32.totalorder %s19, 1
      %p58 = por %p56, %p57
      %p59 = scmp.ne.s32.totalorder %s50, %s51
      %p60 = scmp.eq.s32.totalorder %s19, 0
      %p61 = por %p59, %p60
      %p62 = scmp.ne.s32.totalorder %s50, %s51
      %p63 = scmp.eq.s32.totalorder %s20, 1
      %p64 = por %p62, %p63
      %p66 = scmp.ne.s32.totalorder %s51, %s65
      %p67 = scmp.eq.s32.totalorder %s20, 0
      %p68 = por %p66, %p67
      %s70 = sadd.s32 %s69, 1
      %p73 = scmp.eq.s32.totalorder %s14, 1
      %p74 = scmp.ne.s32.totalorder %s69, %s71
      %p75 = scmp.eq.s32.totalorder %s14, 0
      %p76 = por %p74, %p75
      %p77 = scmp.ne.s32.totalorder %s69, %s71
      %p78 = scmp.eq.s32.totalorder %s19, 1
      %p79 = por %p77, %p78
      %p80 = scmp.ne.s32.totalorder %s71, %s72
      %p81 = scmp.eq.s32.totalorder %s19, 0
      %p82 = por %p80, %p81
      %p83 = scmp.ne.s32.totalorder %s71, %s72
      %p84 = scmp.eq.s32.totalorder %s20, 1
      %p85 = por %p83, %p84
      %p87 = scmp.ne.s32.totalorder %s72, %s86
      %p88 = scmp.eq.s32.totalorder %s20, 0
      %p89 = por %p87, %p88
      %s91 = sadd.s32 %s90, 1
      %p94 = scmp.eq.s32.totalorder %s14, 1
      %p95 = scmp.ne.s32.totalorder %s90, %s92
      %p96 = scmp.eq.s32.totalorder %s14, 0
      %p97 = por %p95, %p96
      %p98 = scmp.ne.s32.totalorder %s90, %s92
      %p99 = scmp.eq.s32.totalorder %s19, 1
      %p100 = por %p98, %p99
      %p101 = scmp.ne.s32.totalorder %s92, %s93
      %p102 = scmp.eq.s32.totalorder %s19, 0
      %p103 = por %p101, %p102
      %p104 = scmp.ne.s32.totalorder %s92, %s93
      %p105 = scmp.eq.s32.totalorder %s20, 1
      %p106 = por %p104, %p105
      %p108 = scmp.ne.s32.totalorder %s93, %s107
      %p109 = scmp.eq.s32.totalorder %s20, 0
      %p110 = por %p108, %p109
      %s112 = sadd.s32 %s111, 1
      %p115 = scmp.eq.s32.totalorder %s14, 1
      %p116 = scmp.ne.s32.totalorder %s111, %s113
      %p117 = scmp.eq.s32.totalorder %s14, 0
      %p118 = por %p116, %p117
      %p119 = scmp.ne.s32.totalorder %s111, %s113
      %p120 = scmp.eq.s32.totalorder %s19, 1
      %p121 = por %p119, %p120
      %p122 = scmp.ne.s32.totalorder %s113, %s114
      %p123 = scmp.eq.s32.totalorder %s19, 0
      %p124 = por %p122, %p123
      %p125 = scmp.ne.s32.totalorder %s113, %s114
      %p126 = scmp.eq.s32.totalorder %s20, 1
      %p127 = por %p125, %p126
      %p129 = scmp.ne.s32.totalorder %s114, %s128
      %p130 = scmp.eq.s32.totalorder %s20, 0
      %p131 = por %p129, %p130
      %s132 = ssub.s32 %s14, %s21
      %p133 = scmp.eq.s32.totalorder %s132, 0
      %s135 = sadd.s32 %s134, 1
      %s136 = scalar_select %p133, %s134, %s135
      %p139 = pneg %p133
      %p140 = scmp.eq.s32.totalorder %s14, 1
      %p141 = por %p139, %p140
      %p142 = scmp.ne.s32.totalorder %s134, %s137
      %p143 = scmp.eq.s32.totalorder %s14, 0
      %p144 = por %p142, %p143
      %p145 = scmp.ne.s32.totalorder %s134, %s137
      %p146 = scmp.eq.s32.totalorder %s19, 1
      %p147 = por %p145, %p146
      %p148 = scmp.ne.s32.totalorder %s137, %s138
      %p149 = scmp.eq.s32.totalorder %s19, 0
      %p150 = por %p148, %p149
      %p151 = scmp.ne.s32.totalorder %s137, %s138
      %p152 = scmp.eq.s32.totalorder %s20, 1
      %p153 = por %p151, %p152
      %p155 = scmp.ne.s32.totalorder %s138, %s154
      %p156 = scmp.eq.s32.totalorder %s20, 0
      %p157 = por %p155, %p156
      %p158 = scmp.le.s32.totalorder 1, %s14
      %p159 = scmp.lt.s32.totalorder %s14, 3
      %p160 = pnand %p158, %p159
      %p161 = pneg %p160
      // Predicated region
      $region9: #{feed_forward.1} parent=5 // pred_check
        _
      $region10: #{feed_forward.1} parent=5 // pred_check_branch
        %163 = sbr.rel (%p160) target = $region12
      $region11: #{feed_forward.1} parent=5 // pred_region
        %s164 = ssub.s32 %s14, 1
        // Predicated region
        $region13: #{feed_forward.1} parent=11 // pred_check
          %p165 = pneg %p61
        $region14: #{feed_forward.1} parent=11 // pred_check_branch
          %167 = sbr.rel (%p165) target = $region16
        $region15: #{feed_forward.1} parent=11 // pred_region
          _
        $region16: #{feed_forward.1} parent=11 // pred_fallthru
          _
        // Predicated region
        $region17: #{feed_forward.1} parent=11 // pred_check
          %p168 = pneg %p82
        $region18: #{feed_forward.1} parent=11 // pred_check_branch
          %170 = sbr.rel (%p168) target = $region20
        $region19: #{feed_forward.1} parent=11 // pred_region
          _
        $region20: #{feed_forward.1} parent=11 // pred_fallthru
          _
        // Predicated region
        $region21: #{feed_forward.1} parent=11 // pred_check
          %p171 = pneg %p103
        $region22: #{feed_forward.1} parent=11 // pred_check_branch
          %173 = sbr.rel (%p171) target = $region24
        $region23: #{feed_forward.1} parent=11 // pred_region
          _
        $region24: #{feed_forward.1} parent=11 // pred_fallthru
          _
        // Predicated region
        $region25: #{feed_forward.1} parent=11 // pred_check
          %p174 = pneg %p124
        $region26: #{feed_forward.1} parent=11 // pred_check_branch
          %176 = sbr.rel (%p174) target = $region28
        $region27: #{feed_forward.1} parent=11 // pred_region
          _
        $region28: #{feed_forward.1} parent=11 // pred_fallthru
          _
      $region12: #{feed_forward.1} parent=5 // pred_fallthru
        _
      %p177 = scmp.lt.s32.totalorder %s14, 2
      // Predicated region
      $region29: #{feed_forward.1} parent=5 // pred_check
        %p178 = pneg %p177
      $region30: #{feed_forward.1} parent=5 // pred_check_branch
        %180 = sbr.rel (%p178) target = $region32
      $region31: #{feed_forward.1} parent=5 // pred_region
        // Predicated region
        $region33: #{feed_forward.1} parent=31 // pred_check
          %p181 = pneg %p34
        $region34: #{feed_forward.1} parent=31 // pred_check_branch
          %183 = sbr.rel (%p181) target = $region36
        $region35: #{feed_forward.1} parent=31 // pred_region
          %s184 = smul.u32 8, %s14
          %p185 = scmp.lt.s32.totalorder %s184, 15
          %s186 = scalar_select %p185, %s184, 15
          %s187 = smul.addr %s186, 8
          %s188 = scalar_lea.vmem %s0, %s187
          %s189 = smul.u32 8, %s14
        $region36: #{feed_forward.1} parent=31 // pred_fallthru
          _
      $region32: #{feed_forward.1} parent=5 // pred_fallthru
        _
      %p190 = scmp.le.s32.totalorder 1, %s14
      %p191 = scmp.lt.s32.totalorder %s14, 3
      %p192 = pnand %p190, %p191
      %p193 = pneg %p192
      // Predicated region
      $region37: #{feed_forward.1} parent=5 // pred_check
        _
      $region38: #{feed_forward.1} parent=5 // pred_check_branch
        %195 = sbr.rel (%p192) target = $region40
      $region39: #{feed_forward.1} parent=5 // pred_region
        %s196 = ssub.s32 %s14, 1
        %s197 = smul.u32 8, %s19
        %p198 = scmp.lt.s32.totalorder %s197, 15
        %s199 = scalar_select %p198, %s197, 15
        %s200 = smul.addr %s199, 8
        %s201 = scalar_lea.vmem %s0, %s200
        %p202 = pneg %p40
        %p203 = pneg %p37
        %p204 = pneg %p61
        %p205 = pneg %p58
        %p206 = pneg %p82
        %p207 = pneg %p79
        %p208 = pneg %p103
        %p209 = pneg %p100
        %p210 = pneg %p124
        %p211 = pneg %p121
        %p212 = pneg %p150
        %p213 = pneg %p147
        %s214 = sand.u32 %s137, 1
        %s215 = scalar_lea.sflag [#allocation3], %s214
        %s216 = sand.u32 %s137, 1
        %s217 = smul.addr %s216, 64
        %s218 = scalar_lea.vmem [#allocation2], %s217
        %s219 = smul.u32 8, %s19
        %p220 = scmp.lt.s32.totalorder %s219, 15
        %s221 = scalar_select %p220, %s219, 15
        %s222 = smul.addr %s221, 8
        %s223 = scalar_lea.vmem %s0, %s222
        %s224 = smul.u32 8, %s19
        %s225 = smul.u32 8, %s19
        %v227 = vld [vmem:[%s223] sm:$0xff]
        %v228 = vld [vmem:[%s223 + $0x8] sm:$0xff]
        %v229 = vld [vmem:[%s223 + $0x10] sm:$0xff]
        %v230 = vld [vmem:[%s223 + $0x18] sm:$0xff]
        %v231 = vld [vmem:[%s223 + $0x20] sm:$0xff]
        %v232 = vld [vmem:[%s223 + $0x28] sm:$0xff]
        %v233 = vld [vmem:[%s223 + $0x30] sm:$0xff]
        %v234 = vld [vmem:[%s223 + $0x38] sm:$0xff]
        %v235 = vpack.c.bf16 %v228, %v227
        %v236 = vpack.c.bf16 %v230, %v229
        %v237 = vpack.c.bf16 %v232, %v231
        %v238 = vpack.c.bf16 %v234, %v233
        %v239 = vld [vmem:[%s1] sm:$0xff]
        %v240 = vld [vmem:[%s1 + $0x8] sm:$0xff]
        %v241 = vld [vmem:[%s1 + $0x10] sm:$0xff]
        %v242 = vld [vmem:[%s1 + $0x18] sm:$0xff]
        %v243 = vld [vmem:[%s1 + $0x20] sm:$0xff]
        %v244 = vld [vmem:[%s1 + $0x28] sm:$0xff]
        %v245 = vld [vmem:[%s1 + $0x30] sm:$0xff]
        %v246 = vld [vmem:[%s1 + $0x38] sm:$0xff]
        %v247 = vld [vmem:[%s1 + $0x40] sm:$0xff]
        %v248 = vld [vmem:[%s1 + $0x48] sm:$0xff]
        %v249 = vld [vmem:[%s1 + $0x50] sm:$0xff]
        %v250 = vld [vmem:[%s1 + $0x58] sm:$0xff]
        %v251 = vld [vmem:[%s1 + $0x60] sm:$0xff]
        %v252 = vld [vmem:[%s1 + $0x68] sm:$0xff]
        %v253 = vld [vmem:[%s1 + $0x70] sm:$0xff]
        %v254 = vld [vmem:[%s1 + $0x78] sm:$0xff]
        %v255 = vld [vmem:[%s1 + $0x80] sm:$0xff]
        %v256 = vld [vmem:[%s1 + $0x88] sm:$0xff]
        %v257 = vld [vmem:[%s1 + $0x90] sm:$0xff]
        %v258 = vld [vmem:[%s1 + $0x98] sm:$0xff]
        %v259 = vld [vmem:[%s1 + $0xa0] sm:$0xff]
        %v260 = vld [vmem:[%s1 + $0xa8] sm:$0xff]
        %v261 = vld [vmem:[%s1 + $0xb0] sm:$0xff]
        %v262 = vld [vmem:[%s1 + $0xb8] sm:$0xff]
        %v263 = vld [vmem:[%s1 + $0xc0] sm:$0xff]
        %v264 = vld [vmem:[%s1 + $0xc8] sm:$0xff]
        %v265 = vld [vmem:[%s1 + $0xd0] sm:$0xff]
        %v266 = vld [vmem:[%s1 + $0xd8] sm:$0xff]
        %v267 = vld [vmem:[%s1 + $0xe0] sm:$0xff]
        %v268 = vld [vmem:[%s1 + $0xe8] sm:$0xff]
        %v269 = vld [vmem:[%s1 + $0xf0] sm:$0xff]
        %v270 = vld [vmem:[%s1 + $0xf8] sm:$0xff]
        %v271 = vld [vmem:[%s2] sm:$0xf]
        %v273 = vlaneseq
        %v274 = vshrl.u32 %v273, 7
        %v275 = vsub.s32 0, %v274
        %v276 = vrot.slane %v271, %v275
        %v277 = vlaneseq
        %v278 = vshrl.u32 %v277, 7
        %v279 = vsub.s32 1, %v278
        %v280 = vrot.slane %v271, %v279
        %v281 = vlaneseq
        %v282 = vshrl.u32 %v281, 7
        %v283 = vsub.s32 2, %v282
        %v284 = vrot.slane %v271, %v283
        %v285 = vlaneseq
        %v286 = vshrl.u32 %v285, 7
        %v287 = vsub.s32 3, %v286
        %v288 = vrot.slane %v271, %v287
        %v325 = vunpack.c.l.b16 %v239
        %v326 = vunpack.c.h.b16 %v239
        %v327 = vunpack.c.l.b16 %v240
        %v328 = vunpack.c.h.b16 %v240
        %v329 = vunpack.c.l.b16 %v241
        %v330 = vunpack.c.h.b16 %v241
        %v331 = vunpack.c.l.b16 %v242
        %v332 = vunpack.c.h.b16 %v242
        %v333 = vunpack.c.l.b16 %v243
        %v334 = vunpack.c.h.b16 %v243
        %v335 = vunpack.c.l.b16 %v244
        %v336 = vunpack.c.h.b16 %v244
        %v337 = vunpack.c.l.b16 %v245
        %v338 = vunpack.c.h.b16 %v245
        %v339 = vunpack.c.l.b16 %v246
        %v340 = vunpack.c.h.b16 %v246
        %v341 = vunpack.c.l.b16 %v247
        %v342 = vunpack.c.h.b16 %v247
        %v343 = vunpack.c.l.b16 %v248
        %v344 = vunpack.c.h.b16 %v248
        %v345 = vunpack.c.l.b16 %v249
        %v346 = vunpack.c.h.b16 %v249
        %v347 = vunpack.c.l.b16 %v250
        %v348 = vunpack.c.h.b16 %v250
        %v349 = vunpack.c.l.b16 %v251
        %v350 = vunpack.c.h.b16 %v251
        %v351 = vunpack.c.l.b16 %v252
        %v352 = vunpack.c.h.b16 %v252
        %v353 = vunpack.c.l.b16 %v253
        %v354 = vunpack.c.h.b16 %v253
        %v355 = vunpack.c.l.b16 %v254
        %v356 = vunpack.c.h.b16 %v254
        %v357 = vunpack.c.l.b16 %v255
        %v358 = vunpack.c.h.b16 %v255
        %v359 = vunpack.c.l.b16 %v256
        %v360 = vunpack.c.h.b16 %v256
        %v361 = vunpack.c.l.b16 %v257
        %v362 = vunpack.c.h.b16 %v257
        %v363 = vunpack.c.l.b16 %v258
        %v364 = vunpack.c.h.b16 %v258
        %v365 = vunpack.c.l.b16 %v259
        %v366 = vunpack.c.h.b16 %v259
        %v367 = vunpack.c.l.b16 %v260
        %v368 = vunpack.c.h.b16 %v260
        %v369 = vunpack.c.l.b16 %v261
        %v370 = vunpack.c.h.b16 %v261
        %v371 = vunpack.c.l.b16 %v262
        %v372 = vunpack.c.h.b16 %v262
        %v373 = vunpack.c.l.b16 %v263
        %v374 = vunpack.c.h.b16 %v263
        %v375 = vunpack.c.l.b16 %v264
        %v376 = vunpack.c.h.b16 %v264
        %v377 = vunpack.c.l.b16 %v265
        %v378 = vunpack.c.h.b16 %v265
        %v379 = vunpack.c.l.b16 %v266
        %v380 = vunpack.c.h.b16 %v266
        %v381 = vunpack.c.l.b16 %v267
        %v382 = vunpack.c.h.b16 %v267
        %v383 = vunpack.c.l.b16 %v268
        %v384 = vunpack.c.h.b16 %v268
        %v385 = vunpack.c.l.b16 %v269
        %v386 = vunpack.c.h.b16 %v269
        %v387 = vunpack.c.l.b16 %v270
        %v388 = vunpack.c.h.b16 %v270
        %v389 = vpack.c.b16 %v329, %v325
        %v390 = vpack.c.b16 %v330, %v326
        %v391 = vpack.c.b16 %v331, %v327
        %v392 = vpack.c.b16 %v332, %v328
        %v393 = vpack.c.b16 %v337, %v333
        %v394 = vpack.c.b16 %v338, %v334
        %v395 = vpack.c.b16 %v339, %v335
        %v396 = vpack.c.b16 %v340, %v336
        %v397 = vpack.c.b16 %v345, %v341
        %v398 = vpack.c.b16 %v346, %v342
        %v399 = vpack.c.b16 %v347, %v343
        %v400 = vpack.c.b16 %v348, %v344
        %v401 = vpack.c.b16 %v353, %v349
        %v402 = vpack.c.b16 %v354, %v350
        %v403 = vpack.c.b16 %v355, %v351
        %v404 = vpack.c.b16 %v356, %v352
        %v405 = vpack.c.b16 %v361, %v357
        %v406 = vpack.c.b16 %v362, %v358
        %v407 = vpack.c.b16 %v363, %v359
        %v408 = vpack.c.b16 %v364, %v360
        %v409 = vpack.c.b16 %v369, %v365
        %v410 = vpack.c.b16 %v370, %v366
        %v411 = vpack.c.b16 %v371, %v367
        %v412 = vpack.c.b16 %v372, %v368
        %v413 = vpack.c.b16 %v377, %v373
        %v414 = vpack.c.b16 %v378, %v374
        %v415 = vpack.c.b16 %v379, %v375
        %v416 = vpack.c.b16 %v380, %v376
        %v417 = vpack.c.b16 %v385, %v381
        %v418 = vpack.c.b16 %v386, %v382
        %v419 = vpack.c.b16 %v387, %v383
        %v420 = vpack.c.b16 %v388, %v384
        %453 = vmatprep.subr.bf16.mxu0 %v390
        %454 = vmatpush1.bf16.msra.mxu0 %v389
        %455 = vmatprep.subr.bf16.mxu0 %v394
        %456 = vmatpush1.bf16.msra.mxu0 %v393
        %457 = vmatprep.subr.bf16.mxu0 %v398
        %458 = vmatpush1.bf16.msra.mxu0 %v397
        %459 = vmatprep.subr.bf16.mxu0 %v402
        %460 = vmatpush1.bf16.msra.mxu0 %v401
        %461 = vmatprep.subr.bf16.mxu0 %v406
        %462 = vmatpush1.bf16.msra.mxu0 %v405
        %463 = vmatprep.subr.bf16.mxu0 %v410
        %464 = vmatpush1.bf16.msra.mxu0 %v409
        %465 = vmatprep.subr.bf16.mxu0 %v414
        %466 = vmatpush1.bf16.msra.mxu0 %v413
        %467 = vmatprep.subr.bf16.mxu0 %v418
        %468 = vmatpush1.bf16.msra.mxu0 %v417
        %469 = vmatprep.subr.bf16.mxu0 0
        %470 = vmatpush1.bf16.msra.mxu0 0
        %471 = vmatprep.subr.bf16.mxu0 0
        %472 = vmatpush1.bf16.msra.mxu0 0
        %473 = vmatprep.subr.bf16.mxu0 0
        %474 = vmatpush1.bf16.msra.mxu0 0
        %475 = vmatprep.subr.bf16.mxu0 0
        %476 = vmatpush1.bf16.msra.mxu0 0
        %477 = vmatprep.subr.bf16.mxu0 0
        %478 = vmatpush1.bf16.msra.mxu0 0
        %479 = vmatprep.subr.bf16.mxu0 0
        %480 = vmatpush1.bf16.msra.mxu0 0
        %481 = vmatprep.subr.bf16.mxu0 0
        %482 = vmatpush1.bf16.msra.mxu0 0
        %483 = vmatprep.subr.bf16.mxu0 0
        %484 = vmatpush1.bf16.msra.mxu0 0
        %485 = vmatprep.mubr.bf16.mxu0 0
        %486 = vmatmul.mubr.bf16.gmra.mrb[0].mxu0 %v235
        %v487 = vpop.f32.mrb[0].mxu0
        %v488 = vadd.f32 %v276, %v487
        %v489 = vpop.f32.mrb[0].mxu0
        %v490 = vadd.f32 %v280, %v489
        %v491 = vpop.f32.mrb[0].mxu0
        %v492 = vadd.f32 %v276, %v491
        %v493 = vpop.f32.mrb[0].mxu0
        %v494 = vadd.f32 %v280, %v493
        %495 = vmatprep.mubr.bf16.mxu0 0
        %496 = vmatmul.mubr.bf16.gmra.mrb[0].mxu0 %v236
        %v497 = vpop.f32.mrb[0].mxu0
        %v498 = vadd.f32 %v276, %v497
        %v499 = vpop.f32.mrb[0].mxu0
        %v500 = vadd.f32 %v280, %v499
        %v501 = vpop.f32.mrb[0].mxu0
        %v502 = vadd.f32 %v276, %v501
        %v503 = vpop.f32.mrb[0].mxu0
        %v504 = vadd.f32 %v280, %v503
        %505 = vmatprep.mubr.bf16.mxu0 0
        %506 = vmatmul.mubr.bf16.gmra.mrb[0].mxu0 %v237
        %v507 = vpop.f32.mrb[0].mxu0
        %v508 = vadd.f32 %v276, %v507
        %v509 = vpop.f32.mrb[0].mxu0
        %v510 = vadd.f32 %v280, %v509
        %v511 = vpop.f32.mrb[0].mxu0
        %v512 = vadd.f32 %v276, %v511
        %v513 = vpop.f32.mrb[0].mxu0
        %v514 = vadd.f32 %v280, %v513
        %515 = vmatprep.mubr.bf16.mxu0 0
        %516 = vmatmul.mubr.bf16.gmra.mrb[0].mxu0 %v238
        %v517 = vpop.f32.mrb[0].mxu0
        %v518 = vadd.f32 %v276, %v517
        %v519 = vpop.f32.mrb[0].mxu0
        %v520 = vadd.f32 %v280, %v519
        %v521 = vpop.f32.mrb[0].mxu0
        %v522 = vadd.f32 %v276, %v521
        %v523 = vpop.f32.mrb[0].mxu0
        %v524 = vadd.f32 %v280, %v523
        %525 = vdwg.mxu0
        %526 = vmatprep.subr.bf16.mxu0 %v392
        %527 = vmatpush1.bf16.msra.mxu0 %v391
        %528 = vmatprep.subr.bf16.mxu0 %v396
        %529 = vmatpush1.bf16.msra.mxu0 %v395
        %530 = vmatprep.subr.bf16.mxu0 %v400
        %531 = vmatpush1.bf16.msra.mxu0 %v399
        %532 = vmatprep.subr.bf16.mxu0 %v404
        %533 = vmatpush1.bf16.msra.mxu0 %v403
        %534 = vmatprep.subr.bf16.mxu0 %v408
        %535 = vmatpush1.bf16.msra.mxu0 %v407
        %536 = vmatprep.subr.bf16.mxu0 %v412
        %537 = vmatpush1.bf16.msra.mxu0 %v411
        %538 = vmatprep.subr.bf16.mxu0 %v416
        %539 = vmatpush1.bf16.msra.mxu0 %v415
        %540 = vmatprep.subr.bf16.mxu0 %v420
        %541 = vmatpush1.bf16.msra.mxu0 %v419
        %542 = vmatprep.subr.bf16.mxu0 0
        %543 = vmatpush1.bf16.msra.mxu0 0
        %544 = vmatprep.subr.bf16.mxu0 0
        %545 = vmatpush1.bf16.msra.mxu0 0
        %546 = vmatprep.subr.bf16.mxu0 0
        %547 = vmatpush1.bf16.msra.mxu0 0
        %548 = vmatprep.subr.bf16.mxu0 0
        %549 = vmatpush1.bf16.msra.mxu0 0
        %550 = vmatprep.subr.bf16.mxu0 0
        %551 = vmatpush1.bf16.msra.mxu0 0
        %552 = vmatprep.subr.bf16.mxu0 0
        %553 = vmatpush1.bf16.msra.mxu0 0
        %554 = vmatprep.subr.bf16.mxu0 0
        %555 = vmatpush1.bf16.msra.mxu0 0
        %556 = vmatprep.subr.bf16.mxu0 0
        %557 = vmatpush1.bf16.msra.mxu0 0
        %558 = vmatprep.mubr.bf16.mxu0 0
        %559 = vmatmul.mubr.bf16.gmra.mrb[0].mxu0 %v235
        %v560 = vpop.f32.mrb[0].mxu0
        %v561 = vadd.f32 %v284, %v560
        %v562 = vpop.f32.mrb[0].mxu0
        %v563 = vadd.f32 %v288, %v562
        %v564 = vpop.f32.mrb[0].mxu0
        %v565 = vadd.f32 %v284, %v564
        %v566 = vpop.f32.mrb[0].mxu0
        %v567 = vadd.f32 %v288, %v566
        %568 = vmatprep.mubr.bf16.mxu0 0
        %569 = vmatmul.mubr.bf16.gmra.mrb[0].mxu0 %v236
        %v570 = vpop.f32.mrb[0].mxu0
        %v571 = vadd.f32 %v284, %v570
        %v572 = vpop.f32.mrb[0].mxu0
        %v573 = vadd.f32 %v288, %v572
        %v574 = vpop.f32.mrb[0].mxu0
        %v575 = vadd.f32 %v284, %v574
        %v576 = vpop.f32.mrb[0].mxu0
        %v577 = vadd.f32 %v288, %v576
        %578 = vmatprep.mubr.bf16.mxu0 0
        %579 = vmatmul.mubr.bf16.gmra.mrb[0].mxu0 %v237
        %v580 = vpop.f32.mrb[0].mxu0
        %v581 = vadd.f32 %v284, %v580
        %v582 = vpop.f32.mrb[0].mxu0
        %v583 = vadd.f32 %v288, %v582
        %v584 = vpop.f32.mrb[0].mxu0
        %v585 = vadd.f32 %v284, %v584
        %v586 = vpop.f32.mrb[0].mxu0
        %v587 = vadd.f32 %v288, %v586
        %588 = vmatprep.mubr.bf16.mxu0 0
        %589 = vmatmul.mubr.bf16.gmra.mrb[0].mxu0 %v238
        %v590 = vpop.f32.mrb[0].mxu0
        %v591 = vadd.f32 %v284, %v590
        %v592 = vpop.f32.mrb[0].mxu0
        %v593 = vadd.f32 %v288, %v592
        %v594 = vpop.f32.mrb[0].mxu0
        %v595 = vadd.f32 %v284, %v594
        %v596 = vpop.f32.mrb[0].mxu0
        %v597 = vadd.f32 %v288, %v596
        %598 = vdwg.mxu0
        %v599 = vmul.f32 %v488, 0.5
        %v600 = vmul.f32 %v490, 0.5
        %v601 = vmul.f32 %v561, 0.5
        %v602 = vmul.f32 %v563, 0.5
        %v603 = vmul.f32 %v492, 0.5
        %v604 = vmul.f32 %v494, 0.5
        %v605 = vmul.f32 %v565, 0.5
        %v606 = vmul.f32 %v567, 0.5
        %v607 = vmul.f32 %v498, 0.5
        %v608 = vmul.f32 %v500, 0.5
        %v609 = vmul.f32 %v571, 0.5
        %v610 = vmul.f32 %v573, 0.5
        %v611 = vmul.f32 %v502, 0.5
        %v612 = vmul.f32 %v504, 0.5
        %v613 = vmul.f32 %v575, 0.5
        %v614 = vmul.f32 %v577, 0.5
        %v615 = vmul.f32 %v508, 0.5
        %v616 = vmul.f32 %v510, 0.5
        %v617 = vmul.f32 %v581, 0.5
        %v618 = vmul.f32 %v583, 0.5
        %v619 = vmul.f32 %v512, 0.5
        %v620 = vmul.f32 %v514, 0.5
        %v621 = vmul.f32 %v585, 0.5
        %v622 = vmul.f32 %v587, 0.5
        %v623 = vmul.f32 %v518, 0.5
        %v624 = vmul.f32 %v520, 0.5
        %v625 = vmul.f32 %v591, 0.5
        %v626 = vmul.f32 %v593, 0.5
        %v627 = vmul.f32 %v522, 0.5
        %v628 = vmul.f32 %v524, 0.5
        %v629 = vmul.f32 %v595, 0.5
        %v630 = vmul.f32 %v597, 0.5
        %v631 = vmul.f32 %v488, 0.044715
        %v632 = vmul.f32 %v490, 0.044715
        %v633 = vmul.f32 %v561, 0.044715
        %v634 = vmul.f32 %v563, 0.044715
        %v635 = vmul.f32 %v492, 0.044715
        %v636 = vmul.f32 %v494, 0.044715
        %v637 = vmul.f32 %v565, 0.044715
        %v638 = vmul.f32 %v567, 0.044715
        %v639 = vmul.f32 %v498, 0.044715
        %v640 = vmul.f32 %v500, 0.044715
        %v641 = vmul.f32 %v571, 0.044715
        %v642 = vmul.f32 %v573, 0.044715
        %v643 = vmul.f32 %v502, 0.044715
        %v644 = vmul.f32 %v504, 0.044715
        %v645 = vmul.f32 %v575, 0.044715
        %v646 = vmul.f32 %v577, 0.044715
        %v647 = vmul.f32 %v508, 0.044715
        %v648 = vmul.f32 %v510, 0.044715
        %v649 = vmul.f32 %v581, 0.044715
        %v650 = vmul.f32 %v583, 0.044715
        %v651 = vmul.f32 %v512, 0.044715
        %v652 = vmul.f32 %v514, 0.044715
        %v653 = vmul.f32 %v585, 0.044715
        %v654 = vmul.f32 %v587, 0.044715
        %v655 = vmul.f32 %v518, 0.044715
        %v656 = vmul.f32 %v520, 0.044715
        %v657 = vmul.f32 %v591, 0.044715
        %v658 = vmul.f32 %v593, 0.044715
        %v659 = vmul.f32 %v522, 0.044715
        %v660 = vmul.f32 %v524, 0.044715
        %v661 = vmul.f32 %v595, 0.044715
        %v662 = vmul.f32 %v597, 0.044715
        %v663 = vmul.f32 %v631, %v488
        %v664 = vmul.f32 %v632, %v490
        %v665 = vmul.f32 %v633, %v561
        %v666 = vmul.f32 %v634, %v563
        %v667 = vmul.f32 %v635, %v492
        %v668 = vmul.f32 %v636, %v494
        %v669 = vmul.f32 %v637, %v565
        %v670 = vmul.f32 %v638, %v567
        %v671 = vmul.f32 %v639, %v498
        %v672 = vmul.f32 %v640, %v500
        %v673 = vmul.f32 %v641, %v571
        %v674 = vmul.f32 %v642, %v573
        %v675 = vmul.f32 %v643, %v502
        %v676 = vmul.f32 %v644, %v504
        %v677 = vmul.f32 %v645, %v575
        %v678 = vmul.f32 %v646, %v577
        %v679 = vmul.f32 %v647, %v508
        %v680 = vmul.f32 %v648, %v510
        %v681 = vmul.f32 %v649, %v581
        %v682 = vmul.f32 %v650, %v583
        %v683 = vmul.f32 %v651, %v512
        %v684 = vmul.f32 %v652, %v514
        %v685 = vmul.f32 %v653, %v585
        %v686 = vmul.f32 %v654, %v587
        %v687 = vmul.f32 %v655, %v518
        %v688 = vmul.f32 %v656, %v520
        %v689 = vmul.f32 %v657, %v591
        %v690 = vmul.f32 %v658, %v593
        %v691 = vmul.f32 %v659, %v522
        %v692 = vmul.f32 %v660, %v524
        %v693 = vmul.f32 %v661, %v595
        %v694 = vmul.f32 %v662, %v597
        %v695 = vmul.f32 %v663, %v488
        %v696 = vmul.f32 %v664, %v490
        %v697 = vmul.f32 %v665, %v561
        %v698 = vmul.f32 %v666, %v563
        %v699 = vmul.f32 %v667, %v492
        %v700 = vmul.f32 %v668, %v494
        %v701 = vmul.f32 %v669, %v565
        %v702 = vmul.f32 %v670, %v567
        %v703 = vmul.f32 %v671, %v498
        %v704 = vmul.f32 %v672, %v500
        %v705 = vmul.f32 %v673, %v571
        %v706 = vmul.f32 %v674, %v573
        %v707 = vmul.f32 %v675, %v502
        %v708 = vmul.f32 %v676, %v504
        %v709 = vmul.f32 %v677, %v575
        %v710 = vmul.f32 %v678, %v577
        %v711 = vmul.f32 %v679, %v508
        %v712 = vmul.f32 %v680, %v510
        %v713 = vmul.f32 %v681, %v581
        %v714 = vmul.f32 %v682, %v583
        %v715 = vmul.f32 %v683, %v512
        %v716 = vmul.f32 %v684, %v514
        %v717 = vmul.f32 %v685, %v585
        %v718 = vmul.f32 %v686, %v587
        %v719 = vmul.f32 %v687, %v518
        %v720 = vmul.f32 %v688, %v520
        %v721 = vmul.f32 %v689, %v591
        %v722 = vmul.f32 %v690, %v593
        %v723 = vmul.f32 %v691, %v522
        %v724 = vmul.f32 %v692, %v524
        %v725 = vmul.f32 %v693, %v595
        %v726 = vmul.f32 %v694, %v597
        %v727 = vadd.f32 %v488, %v695
        %v728 = vadd.f32 %v490, %v696
        %v729 = vadd.f32 %v561, %v697
        %v730 = vadd.f32 %v563, %v698
        %v731 = vadd.f32 %v492, %v699
        %v732 = vadd.f32 %v494, %v700
        %v733 = vadd.f32 %v565, %v701
        %v734 = vadd.f32 %v567, %v702
        %v735 = vadd.f32 %v498, %v703
        %v736 = vadd.f32 %v500, %v704
        %v737 = vadd.f32 %v571, %v705
        %v738 = vadd.f32 %v573, %v706
        %v739 = vadd.f32 %v502, %v707
        %v740 = vadd.f32 %v504, %v708
        %v741 = vadd.f32 %v575, %v709
        %v742 = vadd.f32 %v577, %v710
        %v743 = vadd.f32 %v508, %v711
        %v744 = vadd.f32 %v510, %v712
        %v745 = vadd.f32 %v581, %v713
        %v746 = vadd.f32 %v583, %v714
        %v747 = vadd.f32 %v512, %v715
        %v748 = vadd.f32 %v514, %v716
        %v749 = vadd.f32 %v585, %v717
        %v750 = vadd.f32 %v587, %v718
        %v751 = vadd.f32 %v518, %v719
        %v752 = vadd.f32 %v520, %v720
        %v753 = vadd.f32 %v591, %v721
        %v754 = vadd.f32 %v593, %v722
        %v755 = vadd.f32 %v522, %v723
        %v756 = vadd.f32 %v524, %v724
        %v757 = vadd.f32 %v595, %v725
        %v758 = vadd.f32 %v597, %v726
        %v759 = vmul.f32 %v727, 0.7978846
        %v760 = vmul.f32 %v728, 0.7978846
        %v761 = vmul.f32 %v729, 0.7978846
        %v762 = vmul.f32 %v730, 0.7978846
        %v763 = vmul.f32 %v731, 0.7978846
        %v764 = vmul.f32 %v732, 0.7978846
        %v765 = vmul.f32 %v733, 0.7978846
        %v766 = vmul.f32 %v734, 0.7978846
        %v767 = vmul.f32 %v735, 0.7978846
        %v768 = vmul.f32 %v736, 0.7978846
        %v769 = vmul.f32 %v737, 0.7978846
        %v770 = vmul.f32 %v738, 0.7978846
        %v771 = vmul.f32 %v739, 0.7978846
        %v772 = vmul.f32 %v740, 0.7978846
        %v773 = vmul.f32 %v741, 0.7978846
        %v774 = vmul.f32 %v742, 0.7978846
        %v775 = vmul.f32 %v743, 0.7978846
        %v776 = vmul.f32 %v744, 0.7978846
        %v777 = vmul.f32 %v745, 0.7978846
        %v778 = vmul.f32 %v746, 0.7978846
        %v779 = vmul.f32 %v747, 0.7978846
        %v780 = vmul.f32 %v748, 0.7978846
        %v781 = vmul.f32 %v749, 0.7978846
        %v782 = vmul.f32 %v750, 0.7978846
        %v783 = vmul.f32 %v751, 0.7978846
        %v784 = vmul.f32 %v752, 0.7978846
        %v785 = vmul.f32 %v753, 0.7978846
        %v786 = vmul.f32 %v754, 0.7978846
        %v787 = vmul.f32 %v755, 0.7978846
        %v788 = vmul.f32 %v756, 0.7978846
        %v789 = vmul.f32 %v757, 0.7978846
        %v790 = vmul.f32 %v758, 0.7978846
        %v791 = vtanh.pop %v759
        %v792 = vtanh.pop %v760
        %v793 = vtanh.pop %v761
        %v794 = vtanh.pop %v762
        %v795 = vtanh.pop %v763
        %v796 = vtanh.pop %v764
        %v797 = vtanh.pop %v765
        %v798 = vtanh.pop %v766
        %v799 = vtanh.pop %v767
        %v800 = vtanh.pop %v768
        %v801 = vtanh.pop %v769
        %v802 = vtanh.pop %v770
        %v803 = vtanh.pop %v771
        %v804 = vtanh.pop %v772
        %v805 = vtanh.pop %v773
        %v806 = vtanh.pop %v774
        %v807 = vtanh.pop %v775
        %v808 = vtanh.pop %v776
        %v809 = vtanh.pop %v777
        %v810 = vtanh.pop %v778
        %v811 = vtanh.pop %v779
        %v812 = vtanh.pop %v780
        %v813 = vtanh.pop %v781
        %v814 = vtanh.pop %v782
        %v815 = vtanh.pop %v783
        %v816 = vtanh.pop %v784
        %v817 = vtanh.pop %v785
        %v818 = vtanh.pop %v786
        %v819 = vtanh.pop %v787
        %v820 = vtanh.pop %v788
        %v821 = vtanh.pop %v789
        %v822 = vtanh.pop %v790
        %v823 = vadd.f32 %v791, 1.0
        %v824 = vadd.f32 %v792, 1.0
        %v825 = vadd.f32 %v793, 1.0
        %v826 = vadd.f32 %v794, 1.0
        %v827 = vadd.f32 %v795, 1.0
        %v828 = vadd.f32 %v796, 1.0
        %v829 = vadd.f32 %v797, 1.0
        %v830 = vadd.f32 %v798, 1.0
        %v831 = vadd.f32 %v799, 1.0
        %v832 = vadd.f32 %v800, 1.0
        %v833 = vadd.f32 %v801, 1.0
        %v834 = vadd.f32 %v802, 1.0
        %v835 = vadd.f32 %v803, 1.0
        %v836 = vadd.f32 %v804, 1.0
        %v837 = vadd.f32 %v805, 1.0
        %v838 = vadd.f32 %v806, 1.0
        %v839 = vadd.f32 %v807, 1.0
        %v840 = vadd.f32 %v808, 1.0
        %v841 = vadd.f32 %v809, 1.0
        %v842 = vadd.f32 %v810, 1.0
        %v843 = vadd.f32 %v811, 1.0
        %v844 = vadd.f32 %v812, 1.0
        %v845 = vadd.f32 %v813, 1.0
        %v846 = vadd.f32 %v814, 1.0
        %v847 = vadd.f32 %v815, 1.0
        %v848 = vadd.f32 %v816, 1.0
        %v849 = vadd.f32 %v817, 1.0
        %v850 = vadd.f32 %v818, 1.0
        %v851 = vadd.f32 %v819, 1.0
        %v852 = vadd.f32 %v820, 1.0
        %v853 = vadd.f32 %v821, 1.0
        %v854 = vadd.f32 %v822, 1.0
        %v855 = vmul.f32 %v599, %v823
        %v856 = vmul.f32 %v600, %v824
        %v857 = vmul.f32 %v601, %v825
        %v858 = vmul.f32 %v602, %v826
        %v859 = vmul.f32 %v603, %v827
        %v860 = vmul.f32 %v604, %v828
        %v861 = vmul.f32 %v605, %v829
        %v862 = vmul.f32 %v606, %v830
        %v863 = vmul.f32 %v607, %v831
        %v864 = vmul.f32 %v608, %v832
        %v865 = vmul.f32 %v609, %v833
        %v866 = vmul.f32 %v610, %v834
        %v867 = vmul.f32 %v611, %v835
        %v868 = vmul.f32 %v612, %v836
        %v869 = vmul.f32 %v613, %v837
        %v870 = vmul.f32 %v614, %v838
        %v871 = vmul.f32 %v615, %v839
        %v872 = vmul.f32 %v616, %v840
        %v873 = vmul.f32 %v617, %v841
        %v874 = vmul.f32 %v618, %v842
        %v875 = vmul.f32 %v619, %v843
        %v876 = vmul.f32 %v620, %v844
        %v877 = vmul.f32 %v621, %v845
        %v878 = vmul.f32 %v622, %v846
        %v879 = vmul.f32 %v623, %v847
        %v880 = vmul.f32 %v624, %v848
        %v881 = vmul.f32 %v625, %v849
        %v882 = vmul.f32 %v626, %v850
        %v883 = vmul.f32 %v627, %v851
        %v884 = vmul.f32 %v628, %v852
        %v885 = vmul.f32 %v629, %v853
        %v886 = vmul.f32 %v630, %v854
        %v887 = vpack.c.bf16 %v859, %v855
        %v888 = vpack.c.bf16 %v860, %v856
        %v889 = vpack.c.bf16 %v861, %v857
        %v890 = vpack.c.bf16 %v862, %v858
        %v891 = vpack.c.bf16 %v867, %v863
        %v892 = vpack.c.bf16 %v868, %v864
        %v893 = vpack.c.bf16 %v869, %v865
        %v894 = vpack.c.bf16 %v870, %v866
        %v895 = vpack.c.bf16 %v875, %v871
        %v896 = vpack.c.bf16 %v876, %v872
        %v897 = vpack.c.bf16 %v877, %v873
        %v898 = vpack.c.bf16 %v878, %v874
        %v899 = vpack.c.bf16 %v883, %v879
        %v900 = vpack.c.bf16 %v884, %v880
        %v901 = vpack.c.bf16 %v885, %v881
        %v902 = vpack.c.bf16 %v886, %v882
        %v903 = vld [vmem:[%s3] sm:$0xf]
        %v904 = vld [vmem:[%s3 + $0x4] sm:$0xf]
        %v905 = vld [vmem:[%s3 + $0x8] sm:$0xf]
        %v906 = vld [vmem:[%s3 + $0xc] sm:$0xf]
        %v907 = vld [vmem:[%s3 + $0x10] sm:$0xf]
        %v908 = vld [vmem:[%s3 + $0x14] sm:$0xf]
        %v909 = vld [vmem:[%s3 + $0x18] sm:$0xf]
        %v910 = vld [vmem:[%s3 + $0x1c] sm:$0xf]
        %v911 = vld [vmem:[%s3 + $0x20] sm:$0xf]
        %v912 = vld [vmem:[%s3 + $0x24] sm:$0xf]
        %v913 = vld [vmem:[%s3 + $0x28] sm:$0xf]
        %v914 = vld [vmem:[%s3 + $0x2c] sm:$0xf]
        %v915 = vld [vmem:[%s3 + $0x30] sm:$0xf]
        %v916 = vld [vmem:[%s3 + $0x34] sm:$0xf]
        %v917 = vld [vmem:[%s3 + $0x38] sm:$0xf]
        %v918 = vld [vmem:[%s3 + $0x3c] sm:$0xf]
        %v919 = vld [vmem:[%s3 + $0x40] sm:$0xf]
        %v920 = vld [vmem:[%s3 + $0x44] sm:$0xf]
        %v921 = vld [vmem:[%s3 + $0x48] sm:$0xf]
        %v922 = vld [vmem:[%s3 + $0x4c] sm:$0xf]
        %v923 = vld [vmem:[%s3 + $0x50] sm:$0xf]
        %v924 = vld [vmem:[%s3 + $0x54] sm:$0xf]
        %v925 = vld [vmem:[%s3 + $0x58] sm:$0xf]
        %v926 = vld [vmem:[%s3 + $0x5c] sm:$0xf]
        %v927 = vld [vmem:[%s3 + $0x60] sm:$0xf]
        %v928 = vld [vmem:[%s3 + $0x64] sm:$0xf]
        %v929 = vld [vmem:[%s3 + $0x68] sm:$0xf]
        %v930 = vld [vmem:[%s3 + $0x6c] sm:$0xf]
        %v931 = vld [vmem:[%s3 + $0x70] sm:$0xf]
        %v932 = vld [vmem:[%s3 + $0x74] sm:$0xf]
        %v933 = vld [vmem:[%s3 + $0x78] sm:$0xf]
        %v934 = vld [vmem:[%s3 + $0x7c] sm:$0xf]
        %v935 = vld [vmem:[%s3 + $0x80] sm:$0xf]
        %v936 = vld [vmem:[%s3 + $0x84] sm:$0xf]
        %v937 = vld [vmem:[%s3 + $0x88] sm:$0xf]
        %v938 = vld [vmem:[%s3 + $0x8c] sm:$0xf]
        %v939 = vld [vmem:[%s3 + $0x90] sm:$0xf]
        %v940 = vld [vmem:[%s3 + $0x94] sm:$0xf]
        %v941 = vld [vmem:[%s3 + $0x98] sm:$0xf]
        %v942 = vld [vmem:[%s3 + $0x9c] sm:$0xf]
        %v943 = vld [vmem:[%s3 + $0xa0] sm:$0xf]
        %v944 = vld [vmem:[%s3 + $0xa4] sm:$0xf]
        %v945 = vld [vmem:[%s3 + $0xa8] sm:$0xf]
        %v946 = vld [vmem:[%s3 + $0xac] sm:$0xf]
        %v947 = vld [vmem:[%s3 + $0xb0] sm:$0xf]
        %v948 = vld [vmem:[%s3 + $0xb4] sm:$0xf]
        %v949 = vld [vmem:[%s3 + $0xb8] sm:$0xf]
        %v950 = vld [vmem:[%s3 + $0xbc] sm:$0xf]
        %v951 = vld [vmem:[%s3 + $0xc0] sm:$0xf]
        %v952 = vld [vmem:[%s3 + $0xc4] sm:$0xf]
        %v953 = vld [vmem:[%s3 + $0xc8] sm:$0xf]
        %v954 = vld [vmem:[%s3 + $0xcc] sm:$0xf]
        %v955 = vld [vmem:[%s3 + $0xd0] sm:$0xf]
        %v956 = vld [vmem:[%s3 + $0xd4] sm:$0xf]
        %v957 = vld [vmem:[%s3 + $0xd8] sm:$0xf]
        %v958 = vld [vmem:[%s3 + $0xdc] sm:$0xf]
        %v959 = vld [vmem:[%s3 + $0xe0] sm:$0xf]
        %v960 = vld [vmem:[%s3 + $0xe4] sm:$0xf]
        %v961 = vld [vmem:[%s3 + $0xe8] sm:$0xf]
        %v962 = vld [vmem:[%s3 + $0xec] sm:$0xf]
        %v963 = vld [vmem:[%s3 + $0xf0] sm:$0xf]
        %v964 = vld [vmem:[%s3 + $0xf4] sm:$0xf]
        %v965 = vld [vmem:[%s3 + $0xf8] sm:$0xf]
        %v966 = vld [vmem:[%s3 + $0xfc] sm:$0xf]
        %v967 = vld [vmem:[%s4] sm:$0x1]
        %v969 = vlaneseq
        %v970 = vshrl.u32 %v969, 7
        %v971 = vsub.s32 0, %v970
        %v972 = vrot.slane %v967, %v971
        %v1038 = vunpack.c.l.b16 %v903
        %v1039 = vunpack.c.l.b16 %v904
        %v1040 = vunpack.c.l.b16 %v905
        %v1041 = vunpack.c.l.b16 %v906
        %v1042 = vunpack.c.l.b16 %v907
        %v1043 = vunpack.c.l.b16 %v908
        %v1044 = vunpack.c.l.b16 %v909
        %v1045 = vunpack.c.l.b16 %v910
        %v1046 = vunpack.c.l.b16 %v911
        %v1047 = vunpack.c.l.b16 %v912
        %v1048 = vunpack.c.l.b16 %v913
        %v1049 = vunpack.c.l.b16 %v914
        %v1050 = vunpack.c.l.b16 %v915
        %v1051 = vunpack.c.l.b16 %v916
        %v1052 = vunpack.c.l.b16 %v917
        %v1053 = vunpack.c.l.b16 %v918
        %v1054 = vunpack.c.l.b16 %v919
        %v1055 = vunpack.c.l.b16 %v920
        %v1056 = vunpack.c.l.b16 %v921
        %v1057 = vunpack.c.l.b16 %v922
        %v1058 = vunpack.c.l.b16 %v923
        %v1059 = vunpack.c.l.b16 %v924
        %v1060 = vunpack.c.l.b16 %v925
        %v1061 = vunpack.c.l.b16 %v926
        %v1062 = vunpack.c.l.b16 %v927
        %v1063 = vunpack.c.l.b16 %v928
        %v1064 = vunpack.c.l.b16 %v929
        %v1065 = vunpack.c.l.b16 %v930
        %v1066 = vunpack.c.l.b16 %v931
        %v1067 = vunpack.c.l.b16 %v932
        %v1068 = vunpack.c.l.b16 %v933
        %v1069 = vunpack.c.l.b16 %v934
        %v1070 = vunpack.c.l.b16 %v935
        %v1071 = vunpack.c.l.b16 %v936
        %v1072 = vunpack.c.l.b16 %v937
        %v1073 = vunpack.c.l.b16 %v938
        %v1074 = vunpack.c.l.b16 %v939
        %v1075 = vunpack.c.l.b16 %v940
        %v1076 = vunpack.c.l.b16 %v941
        %v1077 = vunpack.c.l.b16 %v942
        %v1078 = vunpack.c.l.b16 %v943
        %v1079 = vunpack.c.l.b16 %v944
        %v1080 = vunpack.c.l.b16 %v945
        %v1081 = vunpack.c.l.b16 %v946
        %v1082 = vunpack.c.l.b16 %v947
        %v1083 = vunpack.c.l.b16 %v948
        %v1084 = vunpack.c.l.b16 %v949
        %v1085 = vunpack.c.l.b16 %v950
        %v1086 = vunpack.c.l.b16 %v951
        %v1087 = vunpack.c.l.b16 %v952
        %v1088 = vunpack.c.l.b16 %v953
        %v1089 = vunpack.c.l.b16 %v954
        %v1090 = vunpack.c.l.b16 %v955
        %v1091 = vunpack.c.l.b16 %v956
        %v1092 = vunpack.c.l.b16 %v957
        %v1093 = vunpack.c.l.b16 %v958
        %v1094 = vunpack.c.l.b16 %v959
        %v1095 = vunpack.c.l.b16 %v960
        %v1096 = vunpack.c.l.b16 %v961
        %v1097 = vunpack.c.l.b16 %v962
        %v1098 = vunpack.c.l.b16 %v963
        %v1099 = vunpack.c.l.b16 %v964
        %v1100 = vunpack.c.l.b16 %v965
        %v1101 = vunpack.c.l.b16 %v966
        %v1102 = vpack.c.b16 %v1039, %v1038
        %v1103 = vpack.c.b16 %v1041, %v1040
        %v1104 = vpack.c.b16 %v1043, %v1042
        %v1105 = vpack.c.b16 %v1045, %v1044
        %v1106 = vpack.c.b16 %v1047, %v1046
        %v1107 = vpack.c.b16 %v1049, %v1048
        %v1108 = vpack.c.b16 %v1051, %v1050
        %v1109 = vpack.c.b16 %v1053, %v1052
        %v1110 = vpack.c.b16 %v1055, %v1054
        %v1111 = vpack.c.b16 %v1057, %v1056
        %v1112 = vpack.c.b16 %v1059, %v1058
        %v1113 = vpack.c.b16 %v1061, %v1060
        %v1114 = vpack.c.b16 %v1063, %v1062
        %v1115 = vpack.c.b16 %v1065, %v1064
        %v1116 = vpack.c.b16 %v1067, %v1066
        %v1117 = vpack.c.b16 %v1069, %v1068
        %v1118 = vpack.c.b16 %v1071, %v1070
        %v1119 = vpack.c.b16 %v1073, %v1072
        %v1120 = vpack.c.b16 %v1075, %v1074
        %v1121 = vpack.c.b16 %v1077, %v1076
        %v1122 = vpack.c.b16 %v1079, %v1078
        %v1123 = vpack.c.b16 %v1081, %v1080
        %v1124 = vpack.c.b16 %v1083, %v1082
        %v1125 = vpack.c.b16 %v1085, %v1084
        %v1126 = vpack.c.b16 %v1087, %v1086
        %v1127 = vpack.c.b16 %v1089, %v1088
        %v1128 = vpack.c.b16 %v1091, %v1090
        %v1129 = vpack.c.b16 %v1093, %v1092
        %v1130 = vpack.c.b16 %v1095, %v1094
        %v1131 = vpack.c.b16 %v1097, %v1096
        %v1132 = vpack.c.b16 %v1099, %v1098
        %v1133 = vpack.c.b16 %v1101, %v1100
        %1166 = vmatprep.subr.bf16.mxu0 0
        %1167 = vmatpush1.bf16.msra.mxu0 %v1102
        %1168 = vmatprep.subr.bf16.mxu0 0
        %1169 = vmatpush1.bf16.msra.mxu0 %v1103
        %1170 = vmatprep.subr.bf16.mxu0 0
        %1171 = vmatpush1.bf16.msra.mxu0 %v1104
        %1172 = vmatprep.subr.bf16.mxu0 0
        %1173 = vmatpush1.bf16.msra.mxu0 %v1105
        %1174 = vmatprep.subr.bf16.mxu0 0
        %1175 = vmatpush1.bf16.msra.mxu0 %v1106
        %1176 = vmatprep.subr.bf16.mxu0 0
        %1177 = vmatpush1.bf16.msra.mxu0 %v1107
        %1178 = vmatprep.subr.bf16.mxu0 0
        %1179 = vmatpush1.bf16.msra.mxu0 %v1108
        %1180 = vmatprep.subr.bf16.mxu0 0
        %1181 = vmatpush1.bf16.msra.mxu0 %v1109
        %1182 = vmatprep.subr.bf16.mxu0 0
        %1183 = vmatpush1.bf16.msra.mxu0 %v1110
        %1184 = vmatprep.subr.bf16.mxu0 0
        %1185 = vmatpush1.bf16.msra.mxu0 %v1111
        %1186 = vmatprep.subr.bf16.mxu0 0
        %1187 = vmatpush1.bf16.msra.mxu0 %v1112
        %1188 = vmatprep.subr.bf16.mxu0 0
        %1189 = vmatpush1.bf16.msra.mxu0 %v1113
        %1190 = vmatprep.subr.bf16.mxu0 0
        %1191 = vmatpush1.bf16.msra.mxu0 %v1114
        %1192 = vmatprep.subr.bf16.mxu0 0
        %1193 = vmatpush1.bf16.msra.mxu0 %v1115
        %1194 = vmatprep.subr.bf16.mxu0 0
        %1195 = vmatpush1.bf16.msra.mxu0 %v1116
        %1196 = vmatprep.subr.bf16.mxu0 0
        %1197 = vmatpush1.bf16.msra.mxu0 %v1117
        %1198 = vmatprep.mubr.bf16.mxu0 %v888
        %1199 = vmatmul.mubr.bf16.gmra.mrb[0].mxu0 %v887
        %v1200 = vpop.f32.mrb[0].mxu0
        %v1201 = vadd.f32 %v972, %v1200
        %v1202 = vpop.f32.mrb[0].mxu0
        %v1203 = vpop.f32.mrb[0].mxu0
        %v1204 = vadd.f32 %v972, %v1203
        %v1205 = vpop.f32.mrb[0].mxu0
        %1206 = vmatprep.mubr.bf16.mxu0 %v892
        %1207 = vmatmul.mubr.bf16.gmra.mrb[0].mxu0 %v891
        %v1208 = vpop.f32.mrb[0].mxu0
        %v1209 = vadd.f32 %v972, %v1208
        %v1210 = vpop.f32.mrb[0].mxu0
        %v1211 = vpop.f32.mrb[0].mxu0
        %v1212 = vadd.f32 %v972, %v1211
        %v1213 = vpop.f32.mrb[0].mxu0
        %1214 = vmatprep.mubr.bf16.mxu0 %v896
        %1215 = vmatmul.mubr.bf16.gmra.mrb[0].mxu0 %v895
        %v1216 = vpop.f32.mrb[0].mxu0
        %v1217 = vadd.f32 %v972, %v1216
        %v1218 = vpop.f32.mrb[0].mxu0
        %v1219 = vpop.f32.mrb[0].mxu0
        %v1220 = vadd.f32 %v972, %v1219
        %v1221 = vpop.f32.mrb[0].mxu0
        %1222 = vmatprep.mubr.bf16.mxu0 %v900
        %1223 = vmatmul.mubr.bf16.gmra.mrb[0].mxu0 %v899
        %v1224 = vpop.f32.mrb[0].mxu0
        %v1225 = vadd.f32 %v972, %v1224
        %v1226 = vpop.f32.mrb[0].mxu0
        %v1227 = vpop.f32.mrb[0].mxu0
        %v1228 = vadd.f32 %v972, %v1227
        %v1229 = vpop.f32.mrb[0].mxu0
        %1230 = vdwg.mxu0
        %1231 = vmatprep.subr.bf16.mxu0 0
        %1232 = vmatpush1.bf16.msra.mxu0 %v1118
        %1233 = vmatprep.subr.bf16.mxu0 0
        %1234 = vmatpush1.bf16.msra.mxu0 %v1119
        %1235 = vmatprep.subr.bf16.mxu0 0
        %1236 = vmatpush1.bf16.msra.mxu0 %v1120
        %1237 = vmatprep.subr.bf16.mxu0 0
        %1238 = vmatpush1.bf16.msra.mxu0 %v1121
        %1239 = vmatprep.subr.bf16.mxu0 0
        %1240 = vmatpush1.bf16.msra.mxu0 %v1122
        %1241 = vmatprep.subr.bf16.mxu0 0
        %1242 = vmatpush1.bf16.msra.mxu0 %v1123
        %1243 = vmatprep.subr.bf16.mxu0 0
        %1244 = vmatpush1.bf16.msra.mxu0 %v1124
        %1245 = vmatprep.subr.bf16.mxu0 0
        %1246 = vmatpush1.bf16.msra.mxu0 %v1125
        %1247 = vmatprep.subr.bf16.mxu0 0
        %1248 = vmatpush1.bf16.msra.mxu0 %v1126
        %1249 = vmatprep.subr.bf16.mxu0 0
        %1250 = vmatpush1.bf16.msra.mxu0 %v1127
        %1251 = vmatprep.subr.bf16.mxu0 0
        %1252 = vmatpush1.bf16.msra.mxu0 %v1128
        %1253 = vmatprep.subr.bf16.mxu0 0
        %1254 = vmatpush1.bf16.msra.mxu0 %v1129
        %1255 = vmatprep.subr.bf16.mxu0 0
        %1256 = vmatpush1.bf16.msra.mxu0 %v1130
        %1257 = vmatprep.subr.bf16.mxu0 0
        %1258 = vmatpush1.bf16.msra.mxu0 %v1131
        %1259 = vmatprep.subr.bf16.mxu0 0
        %1260 = vmatpush1.bf16.msra.mxu0 %v1132
        %1261 = vmatprep.subr.bf16.mxu0 0
        %1262 = vmatpush1.bf16.msra.mxu0 %v1133
        %1263 = vmatprep.mubr.bf16.mxu0 %v890
        %1264 = vmatmul.mubr.bf16.gmra.mrb[0].mxu0 %v889
        %v1265 = vpop.f32.mrb[0].mxu0
        %v1266 = vadd.f32 %v1201, %v1265
        %v1267 = vpop.f32.mrb[0].mxu0
        %v1268 = vpop.f32.mrb[0].mxu0
        %v1269 = vadd.f32 %v1204, %v1268
        %v1270 = vpop.f32.mrb[0].mxu0
        %1271 = vmatprep.mubr.bf16.mxu0 %v894
        %1272 = vmatmul.mubr.bf16.gmra.mrb[0].mxu0 %v893
        %v1273 = vpop.f32.mrb[0].mxu0
        %v1274 = vadd.f32 %v1209, %v1273
        %v1275 = vpop.f32.mrb[0].mxu0
        %v1276 = vpop.f32.mrb[0].mxu0
        %v1277 = vadd.f32 %v1212, %v1276
        %v1278 = vpop.f32.mrb[0].mxu0
        %1279 = vmatprep.mubr.bf16.mxu0 %v898
        %1280 = vmatmul.mubr.bf16.gmra.mrb[0].mxu0 %v897
        %v1281 = vpop.f32.mrb[0].mxu0
        %v1282 = vadd.f32 %v1217, %v1281
        %v1283 = vpop.f32.mrb[0].mxu0
        %v1284 = vpop.f32.mrb[0].mxu0
        %v1285 = vadd.f32 %v1220, %v1284
        %v1286 = vpop.f32.mrb[0].mxu0
        %1287 = vmatprep.mubr.bf16.mxu0 %v902
        %1288 = vmatmul.mubr.bf16.gmra.mrb[0].mxu0 %v901
        %v1289 = vpop.f32.mrb[0].mxu0
        %v1290 = vadd.f32 %v1225, %v1289
        %v1291 = vpop.f32.mrb[0].mxu0
        %v1292 = vpop.f32.mrb[0].mxu0
        %v1293 = vadd.f32 %v1228, %v1292
        %v1294 = vpop.f32.mrb[0].mxu0
        %1295 = vdwg.mxu0
        %1296 = vst [vmem:[%s218] sm:$0xff] %v1266
        %1297 = vst [vmem:[%s218 + $0x8] sm:$0xff] %v1269
        %1298 = vst [vmem:[%s218 + $0x10] sm:$0xff] %v1274
        %1299 = vst [vmem:[%s218 + $0x18] sm:$0xff] %v1277
        %1300 = vst [vmem:[%s218 + $0x20] sm:$0xff] %v1282
        %1301 = vst [vmem:[%s218 + $0x28] sm:$0xff] %v1285
        %1302 = vst [vmem:[%s218 + $0x30] sm:$0xff] %v1290
        %1303 = vst [vmem:[%s218 + $0x38] sm:$0xff] %v1293
        %s1304 = sand.u32 %s137, 1
        %s1305 = scalar_lea.sflag [#allocation3], %s1304
        %s1306 = sand.u32 %s137, 1
        %s1307 = smul.addr %s1306, 64
        %s1308 = scalar_lea.vmem [#allocation2], %s1307
        // Predicated region
        $region41: #{feed_forward.1} parent=39 // pred_check
          %p1309 = pneg %p147
        $region42: #{feed_forward.1} parent=39 // pred_check_branch
          %1311 = sbr.rel (%p1309) target = $region44
        $region43: #{feed_forward.1} parent=39 // pred_region
          %s1312 = smul.u32 8, %s19
          %s1314 = ssub.s32 1024, 1024
          %1315 = vsyncadd %s1305, %s1314
          %s1316 = smul.addr %s1312, 128
          %s1317 = scalar_lea.hbm %s5, %s1316
          %s1318 = sshll.u32 %s1308, 4
          %s1319 = int_to_ptr.vmem [resolvable:$true] %s1318
          %1324 = dma.vmem_to_hbm [thread:$0]  %s1319, 1024, %s1317, %s1305, 128, 128, 8
        $region44: #{feed_forward.1} parent=39 // pred_fallthru
          _
      $region40: #{feed_forward.1} parent=5 // pred_fallthru
        _
      %p1325 = scmp.le.s32.totalorder 2, %s14
      // Predicated region
      $region45: #{feed_forward.1} parent=5 // pred_check
        %p1326 = pneg %p1325
      $region46: #{feed_forward.1} parent=5 // pred_check_branch
        %1328 = sbr.rel (%p1326) target = $region48
      $region47: #{feed_forward.1} parent=5 // pred_region
        %s1329 = ssub.s32 %s14, 2
        // Predicated region
        $region49: #{feed_forward.1} parent=47 // pred_check
          %p1330 = pneg %p153
        $region50: #{feed_forward.1} parent=47 // pred_check_branch
          %1332 = sbr.rel (%p1330) target = $region52
        $region51: #{feed_forward.1} parent=47 // pred_region
          %s1333 = sand.u32 %s138, 1
          %s1334 = scalar_lea.sflag [#allocation3], %s1333
          %s1335 = sand.u32 %s138, 1
          %s1336 = smul.addr %s1335, 64
          %s1337 = scalar_lea.vmem [#allocation2], %s1336
          %1338 = dma.done %s1334, 1024
        $region52: #{feed_forward.1} parent=47 // pred_fallthru
          _
      $region48: #{feed_forward.1} parent=5 // pred_fallthru
        _
    $region6: #{feed_forward.1} parent=1 // loop_footer
      %s18 = sadd.s32 1, %s14
    $region7: #{feed_forward.1} parent=1 // loop_footer_branch
      %13 = sbr.rel target = $region3
    $region8: #{feed_forward.1} parent=1 // loop_exit
      _
    %1339 = vsyncpa [#allocation3], 1
    %s1340 = scalar_lea.sflag [#allocation3], 1
    %1341 = vsyncpa %s1340, 1

</llo_original>
